<compile_context>
chip_gen: v7x
topology: tpu7x:2x2x1
jax: 0.10.0
libtpu: 0.0.40
codegen_flags: <defaults>
</compile_context>

<pallas_src>
import jax
import jax.numpy as jnp
from jax.experimental import pallas as pl
from jax.experimental.pallas import tpu as pltpu


# ----------------------------------------------------------------------------
# Minimal stand-in for escnn's FieldType / GeometricTensor metadata.
# ----------------------------------------------------------------------------
class FieldType:
    """Synthetic field type: only the total fiber size matters for WrapTensor."""

    def __init__(self, size: int):
        self.size = size


class GeometricTensor:
    """Carries the wrapped tensor plus its field type (metadata only)."""

    def __init__(self, tensor: jnp.ndarray, in_type: FieldType):
        assert tensor.shape[1] == in_type.size, (
            f"channel dim {tensor.shape[1]} != field type size {in_type.size}"
        )
        self.tensor = tensor
        self.type = in_type


# ----------------------------------------------------------------------------
# HBM -> HBM DMA copy kernels (no VMEM round-trip, no vreg work at all).
# ----------------------------------------------------------------------------
def _single_dma_kernel(x_hbm, o_hbm, sem):
    # One DMA descriptor covering the whole array.
    cp = pltpu.make_async_copy(x_hbm, o_hbm, sem)
    cp.start()
    cp.wait()


def _make_chunked_dma_kernel(chunk_starts, chunk_rows):
    """Static unroll: issue all chunk DMAs up front (all outstanding), then
    wait on each.  Chunk boundaries are compile-time constants."""

    def kernel(x_hbm, o_hbm, sems):
        copies = []
        for c, (r0, nr) in enumerate(zip(chunk_starts, chunk_rows)):
            cp = pltpu.make_async_copy(
                x_hbm.at[pl.ds(r0, nr)],
                o_hbm.at[pl.ds(r0, nr)],
                sems.at[c],
            )
            cp.start()
            copies.append(cp)
        for cp in copies:
            cp.wait()

    return kernel


_CHUNK_BYTES_TARGET = 8 * 1024 * 1024   # ~8 MiB per DMA descriptor
_MAX_INFLIGHT = 8                        # cap on simultaneously outstanding DMAs
_MIN_CHUNKED_BYTES = 1 * 1024 * 1024     # below this a single DMA is plenty


def _sublane_multiple(dtype) -> int:
    """Rows per native packed tile: 8 (4-byte), 16 (2-byte), 32 (1-byte)."""
    return max(8, 32 // jnp.dtype(dtype).itemsize)


def _pick_lanes(total_elems: int):
    """Largest lane-dense width (multiple of 128, <= 4096) dividing the size."""
    for lanes in (4096, 2048, 1024, 512, 256, 128):
        if total_elems % lanes == 0:
            return lanes
    return None


def _plan_chunks(rows: int, row_bytes: int, sub: int):
    """cdiv-based chunking: 2..8 outstanding DMAs, ~8 MiB each, rows rounded
    up to the dtype's packed-tile granularity; last chunk takes the remainder."""
    total_bytes = rows * row_bytes
    want = min(_MAX_INFLIGHT, max(2, -(-total_bytes // _CHUNK_BYTES_TARGET)))
    rpc = -(-rows // want)               # rows per chunk (ceil)
    rpc = -(-rpc // sub) * sub           # round UP to packed-tile granularity
    rpc = min(rpc, rows)
    starts, sizes = [], []
    r = 0
    while r < rows:
        nr = min(rpc, rows - r)
        starts.append(r)
        sizes.append(nr)
        r += nr
    return starts, sizes


def _pallas_identity(x: jnp.ndarray) -> jnp.ndarray:
    """Materialize a fresh copy of x via direct HBM->HBM DMA."""
    total = x.size
    nbytes = total * x.dtype.itemsize
    # Advisory: pure HBM traffic (read + write), zero compute.
    cost = pl.CostEstimate(flops=0, transcendentals=0, bytes_accessed=2 * nbytes)

    lanes = _pick_lanes(total)
    if lanes is None or nbytes <= _MIN_CHUNKED_BYTES:
        # Single whole-array DMA: correct for any shape/dtype/size, never
        # touches VMEM, so there is no OOM / tiling hazard for odd sizes.
        return pl.pallas_call(
            _single_dma_kernel,
            out_shape=jax.ShapeDtypeStruct(x.shape, x.dtype),
            in_specs=[pl.BlockSpec(memory_space=pl.ANY)],
            out_specs=pl.BlockSpec(memory_space=pl.ANY),
            scratch_shapes=[pltpu.SemaphoreType.DMA],
            cost_estimate=cost,
        )(x)

    # Lane-dense flat view (free metadata reshape of a contiguous array) so
    # chunk boundaries are full (sublane x 128-lane) tiles.
    rows = total // lanes
    sub = _sublane_multiple(x.dtype)
    starts, sizes = _plan_chunks(rows, lanes * x.dtype.itemsize, sub)
    n_chunks = len(starts)

    x2d = x.reshape(rows, lanes)
    out2d = pl.pallas_call(
        _make_chunked_dma_kernel(starts, sizes),
        out_shape=jax.ShapeDtypeStruct((rows, lanes), x.dtype),
        in_specs=[pl.BlockSpec(memory_space=pl.ANY)],
        out_specs=pl.BlockSpec(memory_space=pl.ANY),
        scratch_shapes=[pltpu.SemaphoreType.DMA((n_chunks,))],
        cost_estimate=cost,
    )(x2d)
    return out2d.reshape(x.shape)


def wrap_tensor_forward(
    x: jnp.ndarray, in_type: FieldType, materialize: bool = True
) -> GeometricTensor:
    """Equivalent of WrapTensor(in_type).forward(x).

    materialize=False is the optimal path (WrapTensor is metadata-only: zero
    HBM traffic, no kernel).  materialize=True runs the HBM->HBM DMA copy and
    returns a fresh buffer that does not alias the input.
    """
    if not materialize:
        return GeometricTensor(x, in_type)
    return GeometricTensor(_pallas_identity(x), in_type)


if __name__ == "__main__":
    key = jax.random.PRNGKey(0)
    # Small NCHW input consistent with the module's forward.
    N, C, H, W = 2, 4, 16, 16
    x = jax.random.normal(key, (N, C, H, W), dtype=jnp.float32)

    in_type = FieldType(size=C)  # WrapTensor.__init__(in_type)

    # Pallas-materialized path (single whole-array DMA for this small input).
    geo = wrap_tensor_forward(x, in_type, materialize=True)
    jax.block_until_ready(geo.tensor)

    # Semantics check: the wrapped tensor must be bit-identical to the input.
    assert geo.tensor.shape == x.shape
    assert geo.tensor.dtype == x.dtype
    assert bool(jnp.all(geo.tensor == x))
    assert geo.type is in_type

    # Zero-cost metadata-only path (the recommended production path).
    geo_fast = wrap_tensor_forward(x, in_type, materialize=False)
    assert geo_fast.tensor is x
    assert geo_fast.type is in_type

    # Exercise the chunked multi-DMA path on a modestly larger tensor (2 MiB).
    y = jax.random.normal(jax.random.PRNGKey(1), (2, 16, 128, 128), jnp.float32)
    y_copy = _pallas_identity(y)
    jax.block_until_ready(y_copy)
    assert bool(jnp.all(y_copy == y))

    print("KERNEL_OK")
</pallas_src>

<mosaic_0001>
module attributes {stable_mosaic.version = 11 : i64} {
  func.func @_single_dma_kernel(%arg0: memref<2x4x16x16xf32, #tpu.memory_space<any>>, %arg1: memref<2x4x16x16xf32, #tpu.memory_space<any>>, %arg2: memref<!tpu.dma_semaphore, #tpu.memory_space<semaphore_mem>>) attributes {dimension_semantics = [], scalar_prefetch = 0 : i64, scratch_operands = 1 : i64, tpu.core_type = #tpu.core_type<tc>} {
    tpu.enqueue_dma source(%arg0 : memref<2x4x16x16xf32, #tpu.memory_space<any>>) target(%arg1 : memref<2x4x16x16xf32, #tpu.memory_space<any>>) target_semaphore(%arg2 : memref<!tpu.dma_semaphore, #tpu.memory_space<semaphore_mem>>)
    tpu.wait_dma2 semaphore(%arg2 : memref<!tpu.dma_semaphore, #tpu.memory_space<semaphore_mem>>) src(%arg0 : memref<2x4x16x16xf32, #tpu.memory_space<any>>) dst(%arg1 : memref<2x4x16x16xf32, #tpu.memory_space<any>>)
    return
  }
}

</mosaic_0001>

<llo_original>
// kernel: tpu_custom_call.1
$region0: #{tpu_custom_call.1}
  #allocation0 [shape = 'u32[]', space=smem, size = 0x4, offset = 0x4, fixed_abs, tag = 'smem constant byte address 0x4 - core index']
  #allocation1 [shape = 'u32[144,128]{1,0:T(1,128)}', space=vmem, size = 0x12000, scoped, tag = 'internal scratch']
  #allocation2 [shape = 's32[1]{0}', space=sflag, size = 0x4, scoped, tag = 'scratch operand']
  #allocation3 [shape = 's32[]', space=sflag, size = 0x4, offset = 0, fixed_abs, tag = 'sflag constant byte address 0x0 - dummy sync flag']
  #allocation4 [shape = 'u32[0]{0}', space=smem, size = 0, offset = 0, fixed_abs, tag = 'smem constant byte address 0x0 - null']
  %s0 = inlined_call_operand.hbm [shape: f32[2,4,16,16], index: 0, kind: input, shape index: {}]
  %s1 = inlined_call_operand.hbm [shape: f32[2,4,16,16], index: 1, kind: output, shape index: {}]
  %s2 = sld [smem:[#allocation0]]
  $region2: #{tpu_custom_call.1} parent=0
    _
  %s4 = ssub.s32 1, %s2
  %s5 = scalar_select 0, %s4, %s2
  %s7 = sshll.u32 1, 14
  %s8 = sxor.u32 4294967295, %s7
  %s11 = sshll.u32 3, 24
  %s12 = sxor.u32 4294967295, %s11
  %s13 = sand.u32 0, %s12
  %s15 = sor.u32 %s13, 0
  %18 = dma.general %s0, 2048, %s1, [#allocation2], [#allocation3], [#allocation4], %s15, 0
  %s19 = smul.u32 2, 4
  %s20 = smul.u32 %s19, 16
  %s21 = smul.u32 %s20, 1
  %s22 = sshll.u32 %s21, 4
  %23 = dma.done [#allocation2], %s22
  %24 = vsyncmov [#allocation2]
  %s25 = vpop.sfrf %24
  %p26 = scmp.eq.s32.totalorder %s25, 0
  %p27 = pneg %p26
  %29 = shalt.err (%p27)

</llo_original>
